<compile_context>
chip_gen: v6e
topology: v6e:2x2x1
jax: 0.10.0
libtpu: 0.0.40
codegen_flags: <defaults>
</compile_context>

<pallas_src>
import functools

import jax
import jax.numpy as jnp
from jax.experimental import pallas as pl
from jax.experimental.pallas import tpu as pltpu


# ---------------------------------------------------------------------------
# Kernel 1: fused separable bilinear warp + residual   res = fix - warp(mov, disp)
# ---------------------------------------------------------------------------
def _warp_residual_kernel(gxy_ref, disp_ref, mov_ref, fix_ref, res_ref, *, C, H, W):
    """One grid step == (one batch element, one output-pixel tile).

    gxy_ref  : (2, TP)      identity pixel grid for this tile (row 0 = x, row 1 = y)
    disp_ref : (1, 2, TP)   channel 0 = dx (along W), channel 1 = dy (along H)
    mov_ref  : (1, C*H, W)  full moving image for this batch (x on lanes for MXU)
    fix_ref  : (1, C, TP)   fixed-image tile, lane-dense
    res_ref  : (1, C, TP)   residual tile, lane-dense
    """
    TP = fix_ref.shape[-1]

    # sample coordinates = identity grid + displacement (pixel units); no div/mod
    sxy = gxy_ref[...] + disp_ref[0]                       # (2, TP)
    sx = sxy[0:1, :]                                       # (1, TP)
    sy = sxy[1:2, :]                                       # (1, TP)

    x0f = jnp.floor(sx)
    y0f = jnp.floor(sy)
    wx1 = sx - x0f
    wx0 = 1.0 - wx1
    wy1 = sy - y0f
    wy0 = 1.0 - wy1
    x0 = x0f.astype(jnp.int32)
    y0 = y0f.astype(jnp.int32)
    x1 = x0 + 1
    y1 = y0 + 1

    # Separable one-hot sampling weights.  Out-of-range corners never match an
    # in-range row index, so zeros-padding is automatic (no valid mask needed).
    # One select per corner (jnp.where) instead of compare->convert->multiply.
    xi = jax.lax.broadcasted_iota(jnp.int32, (W, TP), 0)
    Sx = jnp.where(xi == x0, wx0, 0.0) + jnp.where(xi == x1, wx1, 0.0)   # (W, TP)

    yi = jax.lax.broadcasted_iota(jnp.int32, (H, TP), 0)
    Ay = jnp.where(yi == y0, wy0, 0.0) + jnp.where(yi == y1, wy1, 0.0)   # (H, TP)

    # Stage 1 (x-direction) on the MXU:  (C*H, W) @ (W, TP)
    mov = mov_ref[0]                                                     # (C*H, W)
    t = jnp.dot(mov, Sx, preferred_element_type=jnp.float32)             # (C*H, TP)

    # Stage 2 (y-direction): per-channel weighted reduce over H (VPU + sublane sum).
    # Static, tile-aligned slices of t; unrolled over the (small) channel count.
    warp_rows = []
    for c in range(C):
        tc = t[c * H:(c + 1) * H, :]                                     # (H, TP)
        warp_rows.append(jnp.sum(tc * Ay, axis=0, keepdims=True))        # (1, TP)
    warp = jnp.concatenate(warp_rows, axis=0)                            # (C, TP)

    res_ref[0] = (fix_ref[0] - warp).astype(res_ref.dtype)


def _pick_tile_p(P, max_tile=2048):
    """Largest multiple-of-128 divisor of P not exceeding max_tile (or P itself)."""
    if P <= max_tile or P % 128 != 0:
        return P
    t = max_tile
    while t >= 128:
        if P % t == 0:
            return t
        t -= 128
    return P


def _warp_residual_call(mov_chw, fix_flat, disp_flat, gxy, H, W):
    """mov_chw: (N, C*H, W); fix_flat: (N, C, P); disp_flat: (N, 2, P); gxy: (2, P)."""
    N, CH, _ = mov_chw.shape
    C = fix_flat.shape[1]
    P = fix_flat.shape[-1]
    TP = _pick_tile_p(P)
    kernel = functools.partial(_warp_residual_kernel, C=C, H=H, W=W)

    flops = 2 * N * CH * W * P + 2 * N * C * H * P          # MXU stage + y stage
    bytes_accessed = 4 * (3 * N * C * P + 2 * N * P + 2 * P)  # mov+fix+res, disp, grid

    return pl.pallas_call(
        kernel,
        out_shape=jax.ShapeDtypeStruct((N, C, P), jnp.float32),
        grid=(N, P // TP),
        in_specs=[
            pl.BlockSpec((2, TP), lambda n, t: (0, t)),          # identity grid
            pl.BlockSpec((1, 2, TP), lambda n, t: (n, 0, t)),    # disp tile
            pl.BlockSpec((1, CH, W), lambda n, t: (n, 0, 0)),    # full mov per batch
            pl.BlockSpec((1, C, TP), lambda n, t: (n, 0, t)),    # fix tile
        ],
        out_specs=pl.BlockSpec((1, C, TP), lambda n, t: (n, 0, t)),
        compiler_params=pltpu.CompilerParams(
            # both axes parallel: batch + pixel-tile (keeps 2 TCs busy on v7x
            # even at N == 1); TILE_P sized against v7x's 64 MiB per-TC VMEM.
            dimension_semantics=("parallel", "parallel"),
            vmem_limit_bytes=32 * 1024 * 1024,
        ),
        cost_estimate=pl.CostEstimate(
            flops=flops, transcendentals=0, bytes_accessed=bytes_accessed),
    )(gxy, disp_flat, mov_chw, fix_flat)


# ---------------------------------------------------------------------------
# Kernel 2 (collapsed): out = alpha * disp + disp, one grid step, no HBM broadcast
# ---------------------------------------------------------------------------
def _refine_kernel(alpha_ref, disp_ref, out_ref):
    d = disp_ref[...]                      # (N, 2, P)
    a = alpha_ref[...]                     # (N, Ca, P), Ca in {1, 2}
    if a.shape != d.shape:                 # static branch: broadcast in-register
        a = jnp.broadcast_to(a, d.shape)
    out_ref[...] = (a * d + d).astype(out_ref.dtype)


def _refine_call(alpha_flat, disp_flat):
    # TODO(synk): at these sizes plain XLA (fused with the encoder's sigmoid) is
    # equally good; kept as a single-step Pallas kernel for completeness.
    N, Ca, P = alpha_flat.shape
    Cd = disp_flat.shape[1]
    return pl.pallas_call(
        _refine_kernel,
        out_shape=jax.ShapeDtypeStruct((N, Cd, P), jnp.float32),
        grid=(1,),
        in_specs=[
            pl.BlockSpec((N, Ca, P), lambda i: (0, 0, 0)),
            pl.BlockSpec((N, Cd, P), lambda i: (0, 0, 0)),
        ],
        out_specs=pl.BlockSpec((N, Cd, P), lambda i: (0, 0, 0)),
    )(alpha_flat, disp_flat)


# ---------------------------------------------------------------------------
# RefineDisp.forward wrapper (mirrors the torch signature)
# ---------------------------------------------------------------------------
def refine_disp_forward(fuse_encoder_fn, disp, fix, mov):
    """disp: (N, 2, H, W) pixel-unit displacement; fix/mov: (N, C, H, W)."""
    N, C, H, W = mov.shape
    P = H * W

    # identity pixel grid computed once outside the kernel (no in-kernel % / //)
    p = jnp.arange(P, dtype=jnp.int32)
    gxy = jnp.stack([(p % W).astype(jnp.float32),
                     (p // W).astype(jnp.float32)], axis=0)          # (2, P)

    res = _warp_residual_call(
        mov.reshape(N, C * H, W).astype(jnp.float32),
        fix.reshape(N, C, P).astype(jnp.float32),
        disp.reshape(N, 2, P).astype(jnp.float32),
        gxy, H, W)

    # external module: fuse_encoder_idx(fix - warp)
    alpha = fuse_encoder_fn(res.reshape(N, C, H, W))

    out = _refine_call(
        alpha.reshape(N, alpha.shape[1], P).astype(jnp.float32),
        disp.reshape(N, 2, P).astype(jnp.float32))
    return out.reshape(N, 2, H, W)


# ---------------------------------------------------------------------------
# Pure-JAX reference (for correctness check)
# ---------------------------------------------------------------------------
def grid_sample_without_grid_ref(mov, disp):
    N, C, H, W = mov.shape
    gy, gx = jnp.meshgrid(jnp.arange(H, dtype=jnp.float32),
                          jnp.arange(W, dtype=jnp.float32), indexing='ij')
    sx = gx[None, :, :] + disp[:, 0]
    sy = gy[None, :, :] + disp[:, 1]
    x0 = jnp.floor(sx)
    y0 = jnp.floor(sy)
    x1 = x0 + 1.0
    y1 = y0 + 1.0
    wx1 = sx - x0
    wx0 = 1.0 - wx1
    wy1 = sy - y0
    wy0 = 1.0 - wy1

    def corner(xi, yi, w):
        valid = ((xi >= 0) & (xi <= W - 1) & (yi >= 0) & (yi <= H - 1)).astype(jnp.float32)
        xi_c = jnp.clip(xi, 0, W - 1).astype(jnp.int32)
        yi_c = jnp.clip(yi, 0, H - 1).astype(jnp.int32)
        vals = jax.vmap(lambda m, yy, xx: m[:, yy, xx])(mov, yi_c, xi_c)   # (N, C, H, W)
        return vals * (w * valid)[:, None, :, :]

    return (corner(x0, y0, wx0 * wy0) + corner(x1, y0, wx1 * wy0)
            + corner(x0, y1, wx0 * wy1) + corner(x1, y1, wx1 * wy1))


def refine_disp_ref(fuse_encoder_fn, disp, fix, mov):
    warp = grid_sample_without_grid_ref(mov, disp)
    alpha = fuse_encoder_fn(fix - warp)
    return alpha * disp + disp


# ---------------------------------------------------------------------------
# Demo fuse_encoder_idx stand-in: 1x1 conv + sigmoid -> (N, 2, H, W) alpha
# ---------------------------------------------------------------------------
def make_fuse_encoder(key, c_in, c_out=2):
    k1, k2 = jax.random.split(key)
    w = jax.random.normal(k1, (c_in, c_out), jnp.float32) * 0.1
    b = jax.random.normal(k2, (c_out,), jnp.float32) * 0.1

    def fn(x_nchw):
        y = jnp.einsum('nchw,ck->nkhw', x_nchw, w) + b[None, :, None, None]
        return jax.nn.sigmoid(y)

    return fn


# ---------------------------------------------------------------------------
if __name__ == "__main__":
    key = jax.random.PRNGKey(0)
    k_mov, k_fix, k_disp, k_enc = jax.random.split(key, 4)

    N, C, H, W = 2, 4, 16, 16          # P = H*W = 256 (lane-dense, multiple of 128)
    mov = jax.random.normal(k_mov, (N, C, H, W), jnp.float32)
    fix = jax.random.normal(k_fix, (N, C, H, W), jnp.float32)
    disp = jax.random.normal(k_disp, (N, 2, H, W), jnp.float32) * 2.0   # pixel offsets

    fuse_encoder_fn = make_fuse_encoder(k_enc, C, 2)

    out = refine_disp_forward(fuse_encoder_fn, disp, fix, mov)
    out = jax.block_until_ready(out)

    ref = refine_disp_ref(fuse_encoder_fn, disp, fix, mov)
    ref = jax.block_until_ready(ref)

    assert out.shape == (N, 2, H, W), out.shape
    err = float(jnp.max(jnp.abs(out - ref)))
    assert err < 1e-3, f"max abs error too large: {err}"
    print("KERNEL_OK")
</pallas_src>

<mosaic_0001>
module attributes {stable_mosaic.version = 11 : i64} {
  func.func @_warp_residual_kernel(%arg0: i32, %arg1: i32, %arg2: memref<2x256xf32, #tpu.memory_space<vmem>>, %arg3: memref<1x2x256xf32, #tpu.memory_space<vmem>>, %arg4: memref<1x64x16xf32, #tpu.memory_space<vmem>>, %arg5: memref<1x4x256xf32, #tpu.memory_space<vmem>>, %arg6: memref<1x4x256xf32, #tpu.memory_space<vmem>>) attributes {dimension_semantics = [#tpu.dimension_semantics<parallel>, #tpu.dimension_semantics<parallel>], iteration_bounds = array<i64: 2, 1>, scalar_prefetch = 0 : i64, scratch_operands = 0 : i64, tpu.core_type = #tpu.core_type<tc>, window_params = [{transform_indices = @transform_0, window_bounds = array<i64: 2, 256>}, {transform_indices = @transform_1, window_bounds = array<i64: 1, 2, 256>}, {transform_indices = @transform_2, window_bounds = array<i64: 1, 64, 16>}, {transform_indices = @transform_3, window_bounds = array<i64: 1, 4, 256>}, {transform_indices = @transform_4, window_bounds = array<i64: 1, 4, 256>}]} {
    %c0 = arith.constant 0 : index
    %c0_0 = arith.constant 0 : index
    %0 = vector.load %arg2[%c0, %c0_0] : memref<2x256xf32, #tpu.memory_space<vmem>>, vector<2x256xf32>
    %c0_1 = arith.constant 0 : index
    %c0_2 = arith.constant 0 : index
    %c0_3 = arith.constant 0 : index
    %1 = vector.load %arg3[%c0_1, %c0_2, %c0_3] : memref<1x2x256xf32, #tpu.memory_space<vmem>>, vector<1x2x256xf32>
    %2 = vector.shape_cast %1 : vector<1x2x256xf32> to vector<2x256xf32>
    %3 = arith.addf %0, %2 : vector<2x256xf32>
    %4 = vector.extract_strided_slice %3 {offsets = [0, 0], sizes = [1, 256], strides = [1, 1]} : vector<2x256xf32> to vector<1x256xf32>
    %5 = vector.extract_strided_slice %3 {offsets = [1, 0], sizes = [1, 256], strides = [1, 1]} : vector<2x256xf32> to vector<1x256xf32>
    %6 = math.floor %4 : vector<1x256xf32>
    %7 = math.floor %5 : vector<1x256xf32>
    %8 = arith.subf %4, %6 : vector<1x256xf32>
    %cst = arith.constant 1.000000e+00 : f32
    %9 = vector.broadcast %cst : f32 to vector<1x256xf32>
    %10 = arith.subf %9, %8 : vector<1x256xf32>
    %11 = arith.subf %5, %7 : vector<1x256xf32>
    %cst_4 = arith.constant 1.000000e+00 : f32
    %12 = vector.broadcast %cst_4 : f32 to vector<1x256xf32>
    %13 = arith.subf %12, %11 : vector<1x256xf32>
    %14 = arith.fptosi %6 : vector<1x256xf32> to vector<1x256xi32>
    %15 = arith.fptosi %7 : vector<1x256xf32> to vector<1x256xi32>
    %c1_i32 = arith.constant 1 : i32
    %16 = vector.broadcast %c1_i32 : i32 to vector<1x256xi32>
    %17 = arith.addi %14, %16 : vector<1x256xi32>
    %c1_i32_5 = arith.constant 1 : i32
    %18 = vector.broadcast %c1_i32_5 : i32 to vector<1x256xi32>
    %19 = arith.addi %15, %18 : vector<1x256xi32>
    %20 = tpu.iota {dimensions = array<i32: 0>} : vector<16x256xi32>
    %21 = vector.broadcast %14 : vector<1x256xi32> to vector<16x256xi32>
    %22 = arith.cmpi eq, %20, %21 : vector<16x256xi32>
    %cst_6 = arith.constant 0.000000e+00 : f32
    %23 = vector.shape_cast %10 : vector<1x256xf32> to vector<1x256xf32>
    %24 = vector.broadcast %23 : vector<1x256xf32> to vector<16x256xf32>
    %25 = vector.broadcast %cst_6 : f32 to vector<16x256xf32>
    %26 = arith.select %22, %24, %25 : vector<16x256xi1>, vector<16x256xf32>
    %27 = vector.broadcast %17 : vector<1x256xi32> to vector<16x256xi32>
    %28 = arith.cmpi eq, %20, %27 : vector<16x256xi32>
    %cst_7 = arith.constant 0.000000e+00 : f32
    %29 = vector.shape_cast %8 : vector<1x256xf32> to vector<1x256xf32>
    %30 = vector.broadcast %29 : vector<1x256xf32> to vector<16x256xf32>
    %31 = vector.broadcast %cst_7 : f32 to vector<16x256xf32>
    %32 = arith.select %28, %30, %31 : vector<16x256xi1>, vector<16x256xf32>
    %33 = arith.addf %26, %32 : vector<16x256xf32>
    %34 = tpu.iota {dimensions = array<i32: 0>} : vector<16x256xi32>
    %35 = vector.broadcast %15 : vector<1x256xi32> to vector<16x256xi32>
    %36 = arith.cmpi eq, %34, %35 : vector<16x256xi32>
    %cst_8 = arith.constant 0.000000e+00 : f32
    %37 = vector.shape_cast %13 : vector<1x256xf32> to vector<1x256xf32>
    %38 = vector.broadcast %37 : vector<1x256xf32> to vector<16x256xf32>
    %39 = vector.broadcast %cst_8 : f32 to vector<16x256xf32>
    %40 = arith.select %36, %38, %39 : vector<16x256xi1>, vector<16x256xf32>
    %41 = vector.broadcast %19 : vector<1x256xi32> to vector<16x256xi32>
    %42 = arith.cmpi eq, %34, %41 : vector<16x256xi32>
    %cst_9 = arith.constant 0.000000e+00 : f32
    %43 = vector.shape_cast %11 : vector<1x256xf32> to vector<1x256xf32>
    %44 = vector.broadcast %43 : vector<1x256xf32> to vector<16x256xf32>
    %45 = vector.broadcast %cst_9 : f32 to vector<16x256xf32>
    %46 = arith.select %42, %44, %45 : vector<16x256xi1>, vector<16x256xf32>
    %47 = arith.addf %40, %46 : vector<16x256xf32>
    %c0_10 = arith.constant 0 : index
    %c0_11 = arith.constant 0 : index
    %c0_12 = arith.constant 0 : index
    %48 = vector.load %arg4[%c0_10, %c0_11, %c0_12] : memref<1x64x16xf32, #tpu.memory_space<vmem>>, vector<1x64x16xf32>
    %49 = vector.shape_cast %48 : vector<1x64x16xf32> to vector<64x16xf32>
    %cst_13 = arith.constant dense<0.000000e+00> : vector<64x256xf32>
    %50 = tpu.matmul %49, %33, %cst_13 {dimension_numbers = #tpu.dot_dimension_numbers<[1], [0], [0], [1], [0, 0, 1, 1], [], []>} : vector<64x16xf32>, vector<16x256xf32>, vector<64x256xf32> -> vector<64x256xf32>
    %51 = vector.extract_strided_slice %50 {offsets = [0, 0], sizes = [16, 256], strides = [1, 1]} : vector<64x256xf32> to vector<16x256xf32>
    %52 = arith.mulf %51, %47 : vector<16x256xf32>
    %cst_14 = arith.constant dense<0.000000e+00> : vector<256xf32>
    %53 = vector.multi_reduction <add>, %52, %cst_14 [0] : vector<16x256xf32> to vector<256xf32>
    %54 = vector.shape_cast %53 : vector<256xf32> to vector<1x256xf32>
    %55 = vector.extract_strided_slice %50 {offsets = [16, 0], sizes = [16, 256], strides = [1, 1]} : vector<64x256xf32> to vector<16x256xf32>
    %56 = arith.mulf %55, %47 : vector<16x256xf32>
    %cst_15 = arith.constant dense<0.000000e+00> : vector<256xf32>
    %57 = vector.multi_reduction <add>, %56, %cst_15 [0] : vector<16x256xf32> to vector<256xf32>
    %58 = vector.shape_cast %57 : vector<256xf32> to vector<1x256xf32>
    %59 = vector.extract_strided_slice %50 {offsets = [32, 0], sizes = [16, 256], strides = [1, 1]} : vector<64x256xf32> to vector<16x256xf32>
    %60 = arith.mulf %59, %47 : vector<16x256xf32>
    %cst_16 = arith.constant dense<0.000000e+00> : vector<256xf32>
    %61 = vector.multi_reduction <add>, %60, %cst_16 [0] : vector<16x256xf32> to vector<256xf32>
    %62 = vector.shape_cast %61 : vector<256xf32> to vector<1x256xf32>
    %63 = vector.extract_strided_slice %50 {offsets = [48, 0], sizes = [16, 256], strides = [1, 1]} : vector<64x256xf32> to vector<16x256xf32>
    %64 = arith.mulf %63, %47 : vector<16x256xf32>
    %cst_17 = arith.constant dense<0.000000e+00> : vector<256xf32>
    %65 = vector.multi_reduction <add>, %64, %cst_17 [0] : vector<16x256xf32> to vector<256xf32>
    %66 = vector.shape_cast %65 : vector<256xf32> to vector<1x256xf32>
    %67 = tpu.concatenate %54, %58, %62, %66 in 0 : vector<1x256xf32>, vector<1x256xf32>, vector<1x256xf32>, vector<1x256xf32> -> vector<4x256xf32>
    %c0_18 = arith.constant 0 : index
    %c0_19 = arith.constant 0 : index
    %c0_20 = arith.constant 0 : index
    %68 = vector.load %arg5[%c0_18, %c0_19, %c0_20] : memref<1x4x256xf32, #tpu.memory_space<vmem>>, vector<1x4x256xf32>
    %69 = vector.shape_cast %68 : vector<1x4x256xf32> to vector<4x256xf32>
    %70 = arith.subf %69, %67 : vector<4x256xf32>
    %c0_21 = arith.constant 0 : index
    %c0_22 = arith.constant 0 : index
    %c0_23 = arith.constant 0 : index
    %71 = vector.load %arg6[%c0_21, %c0_22, %c0_23] : memref<1x4x256xf32, #tpu.memory_space<vmem>>, vector<1x4x256xf32>
    %72 = vector.shape_cast %71 : vector<1x4x256xf32> to vector<4x256xf32>
    %73 = vector.shape_cast %70 : vector<4x256xf32> to vector<1x4x256xf32>
    tpu.vector_store %arg6[%c0_21, %c0_22, %c0_23], %73 {strides = array<i32>} : memref<1x4x256xf32, #tpu.memory_space<vmem>>, vector<1x4x256xf32>,
    return
  }
  func.func @transform_0(%arg0: i32, %arg1: i32) -> (i32, i32) {
    %c0_i32 = arith.constant 0 : i32
    %c0_i32_0 = arith.constant 0 : i32
    return %c0_i32, %arg1 : i32, i32
  }
  func.func @transform_1(%arg0: i32, %arg1: i32) -> (i32, i32, i32) {
    %c0_i32 = arith.constant 0 : i32
    %c0_i32_0 = arith.constant 0 : i32
    return %arg0, %c0_i32, %arg1 : i32, i32, i32
  }
  func.func @transform_2(%arg0: i32, %arg1: i32) -> (i32, i32, i32) {
    %c0_i32 = arith.constant 0 : i32
    %c0_i32_0 = arith.constant 0 : i32
    %c0_i32_1 = arith.constant 0 : i32
    return %arg0, %c0_i32, %c0_i32_0 : i32, i32, i32
  }
  func.func @transform_3(%arg0: i32, %arg1: i32) -> (i32, i32, i32) {
    %c0_i32 = arith.constant 0 : i32
    %c0_i32_0 = arith.constant 0 : i32
    return %arg0, %c0_i32, %arg1 : i32, i32, i32
  }
  func.func @transform_4(%arg0: i32, %arg1: i32) -> (i32, i32, i32) {
    %c0_i32 = arith.constant 0 : i32
    %c0_i32_0 = arith.constant 0 : i32
    return %arg0, %c0_i32, %arg1 : i32, i32, i32
  }
}

</mosaic_0001>

<llo_original>
// kernel: tpu_custom_call.1
$region0: #{tpu_custom_call.1}
  #allocation0 [shape = 'u32[]', space=smem, size = 0x4, offset = 0x4, fixed_abs, tag = 'smem constant byte address 0x4 - core index']
  #allocation1 [shape = 'u32[144,128]{1,0:T(1,128)}', space=vmem, size = 0x12000, scoped, tag = 'internal scratch']
  %s0 = inlined_call_operand.vmem [shape: f32[2,256], index: 0, kind: input, shape index: {}]
  %s1 = inlined_call_operand.vmem [shape: f32[2,2,256], index: 1, kind: input, shape index: {}]
  %s2 = inlined_call_operand.vmem [shape: f32[2,64,16], index: 2, kind: input, shape index: {}]
  %s3 = inlined_call_operand.vmem [shape: f32[2,4,256], index: 3, kind: input, shape index: {}]
  %s4 = inlined_call_operand.hbm [shape: f32[2,4,256], index: 4, kind: output, shape index: {}]
  %s5 = sld [smem:[#allocation0]]
  $region49: #{tpu_custom_call.1} parent=0
    _
  %s7 = ssub.s32 1, %s5
  %s8 = scalar_select 0, %s7, %s5
  $region1: #{tpu_custom_call.1} parent=0
    #allocation2 [shape = 'u8[8192]{0}', space=vmem, size = 0x2000, scoped, tag = 'output window, operand 0']
    #allocation3 [shape = 's32[2]{0}', space=sflag, size = 0x8, scoped, tag = 'scoped memory for tpu_custom_call.1']
    %9 = vsyncpa [#allocation3], 0
    %s10 = scalar_lea.sflag [#allocation3], 1
    %11 = vsyncpa %s10, 0
    loop: start=0, step=1, limit=4
    $region2: #{tpu_custom_call.1} parent=1 // loop_pre_header
      _
    $region3: #{tpu_custom_call.1} parent=1 // loop_header
      %s13 = sphi 0, %s17
      %p14 = scmp.ge.s32.totalorder %s13, 4
      %s20 = sphi 0, %s32
      %s21 = sphi 0, %s28
      %s22 = sphi 0, %s20
      %s23 = sphi 0, %s21
      %s24 = sphi 0, %s22
      %s25 = sphi 0, %s23
      %s35 = sphi 0, %s37
      %s38 = sphi 0, %s35
      %s39 = sphi 0, %s38
      %s55 = sphi 0, %s39
      %s63 = sphi 0, %s65
      %s66 = sphi 0, %s63
      %s67 = sphi 0, %s66
      %s83 = sphi 0, %s67
      %s89 = sphi 0, %s91
      %s92 = sphi 0, %s89
      %s93 = sphi 0, %s92
      %s109 = sphi 0, %s93
      %s117 = sphi 0, %s119
      %s120 = sphi 0, %s117
      %s121 = sphi 0, %s120
      %s137 = sphi 0, %s121
      %s145 = sphi 0, %s147
      %s148 = sphi 0, %s145
      %s149 = sphi 0, %s148
      %s165 = sphi 0, %s149
    $region4: #{tpu_custom_call.1} parent=1 // loop_header_branch
      %16 = sbr.rel (%p14) target = $region8
    $region5: #{tpu_custom_call.1} parent=1 // loop_body
      %s18 = ssub.s32 %s13, 1
      %s19 = ssub.s32 %s13, 2
      %s26 = sadd.s32 1, %s21
      %p27 = scmp.ge.s32.totalorder %s26, 1
      %s28 = scalar_select %p27, 0, %s26
      %s29 = sadd.s32 1, %s20
      %s30 = scalar_select %p27, %s29, %s20
      %p31 = scmp.ge.s32.totalorder %s30, 2
      %s32 = scalar_select %p31, 0, %s30
      %s33 = ssub.s32 %s21, %s28
      %p34 = scmp.eq.s32.totalorder %s33, 0
      %s36 = sadd.s32 %s35, 1
      %s37 = scalar_select %p34, %s35, %s36
      %p40 = pneg %p34
      %p41 = scmp.eq.s32.totalorder %s13, 1
      %p42 = por %p40, %p41
      %p43 = scmp.ne.s32.totalorder %s35, %s38
      %p44 = scmp.eq.s32.totalorder %s13, 0
      %p45 = por %p43, %p44
      %p46 = scmp.ne.s32.totalorder %s35, %s38
      %p47 = scmp.eq.s32.totalorder %s18, 1
      %p48 = por %p46, %p47
      %p49 = scmp.ne.s32.totalorder %s38, %s39
      %p50 = scmp.eq.s32.totalorder %s18, 0
      %p51 = por %p49, %p50
      %p52 = scmp.ne.s32.totalorder %s38, %s39
      %p53 = scmp.eq.s32.totalorder %s19, 1
      %p54 = por %p52, %p53
      %p56 = scmp.ne.s32.totalorder %s39, %s55
      %p57 = scmp.eq.s32.totalorder %s19, 0
      %p58 = por %p56, %p57
      %s59 = ssub.s32 %s20, %s32
      %s60 = ssub.s32 %s21, %s28
      %s61 = sor.u32 %s59, %s60
      %p62 = scmp.eq.s32.totalorder %s61, 0
      %s64 = sadd.s32 %s63, 1
      %s65 = scalar_select %p62, %s63, %s64
      %p68 = pneg %p62
      %p69 = scmp.eq.s32.totalorder %s13, 1
      %p70 = por %p68, %p69
      %p71 = scmp.ne.s32.totalorder %s63, %s66
      %p72 = scmp.eq.s32.totalorder %s13, 0
      %p73 = por %p71, %p72
      %p74 = scmp.ne.s32.totalorder %s63, %s66
      %p75 = scmp.eq.s32.totalorder %s18, 1
      %p76 = por %p74, %p75
      %p77 = scmp.ne.s32.totalorder %s66, %s67
      %p78 = scmp.eq.s32.totalorder %s18, 0
      %p79 = por %p77, %p78
      %p80 = scmp.ne.s32.totalorder %s66, %s67
      %p81 = scmp.eq.s32.totalorder %s19, 1
      %p82 = por %p80, %p81
      %p84 = scmp.ne.s32.totalorder %s67, %s83
      %p85 = scmp.eq.s32.totalorder %s19, 0
      %p86 = por %p84, %p85
      %s87 = ssub.s32 %s20, %s32
      %p88 = scmp.eq.s32.totalorder %s87, 0
      %s90 = sadd.s32 %s89, 1
      %s91 = scalar_select %p88, %s89, %s90
      %p94 = pneg %p88
      %p95 = scmp.eq.s32.totalorder %s13, 1
      %p96 = por %p94, %p95
      %p97 = scmp.ne.s32.totalorder %s89, %s92
      %p98 = scmp.eq.s32.totalorder %s13, 0
      %p99 = por %p97, %p98
      %p100 = scmp.ne.s32.totalorder %s89, %s92
      %p101 = scmp.eq.s32.totalorder %s18, 1
      %p102 = por %p100, %p101
      %p103 = scmp.ne.s32.totalorder %s92, %s93
      %p104 = scmp.eq.s32.totalorder %s18, 0
      %p105 = por %p103, %p104
      %p106 = scmp.ne.s32.totalorder %s92, %s93
      %p107 = scmp.eq.s32.totalorder %s19, 1
      %p108 = por %p106, %p107
      %p110 = scmp.ne.s32.totalorder %s93, %s109
      %p111 = scmp.eq.s32.totalorder %s19, 0
      %p112 = por %p110, %p111
      %s113 = ssub.s32 %s20, %s32
      %s114 = ssub.s32 %s21, %s28
      %s115 = sor.u32 %s113, %s114
      %p116 = scmp.eq.s32.totalorder %s115, 0
      %s118 = sadd.s32 %s117, 1
      %s119 = scalar_select %p116, %s117, %s118
      %p122 = pneg %p116
      %p123 = scmp.eq.s32.totalorder %s13, 1
      %p124 = por %p122, %p123
      %p125 = scmp.ne.s32.totalorder %s117, %s120
      %p126 = scmp.eq.s32.totalorder %s13, 0
      %p127 = por %p125, %p126
      %p128 = scmp.ne.s32.totalorder %s117, %s120
      %p129 = scmp.eq.s32.totalorder %s18, 1
      %p130 = por %p128, %p129
      %p131 = scmp.ne.s32.totalorder %s120, %s121
      %p132 = scmp.eq.s32.totalorder %s18, 0
      %p133 = por %p131, %p132
      %p134 = scmp.ne.s32.totalorder %s120, %s121
      %p135 = scmp.eq.s32.totalorder %s19, 1
      %p136 = por %p134, %p135
      %p138 = scmp.ne.s32.totalorder %s121, %s137
      %p139 = scmp.eq.s32.totalorder %s19, 0
      %p140 = por %p138, %p139
      %s141 = ssub.s32 %s20, %s32
      %s142 = ssub.s32 %s21, %s28
      %s143 = sor.u32 %s141, %s142
      %p144 = scmp.eq.s32.totalorder %s143, 0
      %s146 = sadd.s32 %s145, 1
      %s147 = scalar_select %p144, %s145, %s146
      %p150 = pneg %p144
      %p151 = scmp.eq.s32.totalorder %s13, 1
      %p152 = por %p150, %p151
      %p153 = scmp.ne.s32.totalorder %s145, %s148
      %p154 = scmp.eq.s32.totalorder %s13, 0
      %p155 = por %p153, %p154
      %p156 = scmp.ne.s32.totalorder %s145, %s148
      %p157 = scmp.eq.s32.totalorder %s18, 1
      %p158 = por %p156, %p157
      %p159 = scmp.ne.s32.totalorder %s148, %s149
      %p160 = scmp.eq.s32.totalorder %s18, 0
      %p161 = por %p159, %p160
      %p162 = scmp.ne.s32.totalorder %s148, %s149
      %p163 = scmp.eq.s32.totalorder %s19, 1
      %p164 = por %p162, %p163
      %p166 = scmp.ne.s32.totalorder %s149, %s165
      %p167 = scmp.eq.s32.totalorder %s19, 0
      %p168 = por %p166, %p167
      %p169 = scmp.le.s32.totalorder 1, %s13
      %p170 = scmp.lt.s32.totalorder %s13, 3
      %p171 = pnand %p169, %p170
      %p172 = pneg %p171
      // Predicated region
      $region9: #{tpu_custom_call.1} parent=5 // pred_check
        _
      $region10: #{tpu_custom_call.1} parent=5 // pred_check_branch
        %174 = sbr.rel (%p171) target = $region12
      $region11: #{tpu_custom_call.1} parent=5 // pred_region
        %s175 = ssub.s32 %s13, 1
        // Predicated region
        $region13: #{tpu_custom_call.1} parent=11 // pred_check
          %p176 = pneg %p51
        $region14: #{tpu_custom_call.1} parent=11 // pred_check_branch
          %178 = sbr.rel (%p176) target = $region16
        $region15: #{tpu_custom_call.1} parent=11 // pred_region
          %s179 = smul.u32 2, %s23
          %p180 = scmp.lt.s32.totalorder %s179, 1
          %s181 = scalar_select %p180, %s179, 1
          %s182 = smul.addr %s181, 2
          %s183 = scalar_lea.vmem %s0, %s182
          %s184 = smul.u32 2, %s23
        $region16: #{tpu_custom_call.1} parent=11 // pred_fallthru
          _
      $region12: #{tpu_custom_call.1} parent=5 // pred_fallthru
        _
      %p185 = scmp.lt.s32.totalorder %s13, 2
      // Predicated region
      $region17: #{tpu_custom_call.1} parent=5 // pred_check
        %p186 = pneg %p185
      $region18: #{tpu_custom_call.1} parent=5 // pred_check_branch
        %188 = sbr.rel (%p186) target = $region20
      $region19: #{tpu_custom_call.1} parent=5 // pred_region
        // Predicated region
        $region21: #{tpu_custom_call.1} parent=19 // pred_check
          %p189 = pneg %p73
        $region22: #{tpu_custom_call.1} parent=19 // pred_check_branch
          %191 = sbr.rel (%p189) target = $region24
        $region23: #{tpu_custom_call.1} parent=19 // pred_region
          %s192 = smul.u32 2, %s21
          %p193 = scmp.lt.s32.totalorder %s20, 1
          %s194 = scalar_select %p193, %s20, 1
          %p195 = scmp.lt.s32.totalorder %s192, 1
          %s196 = scalar_select %p195, %s192, 1
          %s197 = smul.addr %s194, 2
          %s198 = sadd.s32 %s196, %s197
          %s199 = smul.addr %s198, 2
          %s200 = scalar_lea.vmem %s1, %s199
          %s201 = smul.u32 2, %s21
        $region24: #{tpu_custom_call.1} parent=19 // pred_fallthru
          _
        // Predicated region
        $region25: #{tpu_custom_call.1} parent=19 // pred_check
          %p202 = pneg %p99
        $region26: #{tpu_custom_call.1} parent=19 // pred_check_branch
          %204 = sbr.rel (%p202) target = $region28
        $region27: #{tpu_custom_call.1} parent=19 // pred_region
          %p205 = scmp.lt.s32.totalorder %s20, 1
          %s206 = scalar_select %p205, %s20, 1
          %s207 = smul.addr %s206, 8
          %s208 = smul.addr %s207, 8
          %s209 = scalar_lea.vmem %s2, %s208
        $region28: #{tpu_custom_call.1} parent=19 // pred_fallthru
          _
        // Predicated region
        $region29: #{tpu_custom_call.1} parent=19 // pred_check
          %p210 = pneg %p127
        $region30: #{tpu_custom_call.1} parent=19 // pred_check_branch
          %212 = sbr.rel (%p210) target = $region32
        $region31: #{tpu_custom_call.1} parent=19 // pred_region
          %s213 = smul.u32 2, %s21
          %p214 = scmp.lt.s32.totalorder %s20, 1
          %s215 = scalar_select %p214, %s20, 1
          %p216 = scmp.lt.s32.totalorder %s213, 1
          %s217 = scalar_select %p216, %s213, 1
          %s218 = smul.addr %s215, 2
          %s219 = sadd.s32 %s217, %s218
          %s220 = smul.addr %s219, 4
          %s221 = scalar_lea.vmem %s3, %s220
          %s222 = smul.u32 2, %s21
        $region32: #{tpu_custom_call.1} parent=19 // pred_fallthru
          _
      $region20: #{tpu_custom_call.1} parent=5 // pred_fallthru
        _
      %p223 = scmp.le.s32.totalorder 1, %s13
      %p224 = scmp.lt.s32.totalorder %s13, 3
      %p225 = pnand %p223, %p224
      %p226 = pneg %p225
      // Predicated region
      $region33: #{tpu_custom_call.1} parent=5 // pred_check
        _
      $region34: #{tpu_custom_call.1} parent=5 // pred_check_branch
        %228 = sbr.rel (%p225) target = $region36
      $region35: #{tpu_custom_call.1} parent=5 // pred_region
        %s229 = ssub.s32 %s13, 1
        %s230 = smul.u32 2, %s23
        %p231 = scmp.lt.s32.totalorder %s230, 1
        %s232 = scalar_select %p231, %s230, 1
        %s233 = smul.addr %s232, 2
        %s234 = scalar_lea.vmem %s0, %s233
        %p235 = pneg %p51
        %p236 = pneg %p48
        %s237 = smul.u32 2, %s23
        %p238 = scmp.lt.s32.totalorder %s22, 1
        %s239 = scalar_select %p238, %s22, 1
        %p240 = scmp.lt.s32.totalorder %s237, 1
        %s241 = scalar_select %p240, %s237, 1
        %s242 = smul.addr %s239, 2
        %s243 = sadd.s32 %s241, %s242
        %s244 = smul.addr %s243, 2
        %s245 = scalar_lea.vmem %s1, %s244
        %p246 = pneg %p79
        %p247 = pneg %p76
        %p248 = scmp.lt.s32.totalorder %s22, 1
        %s249 = scalar_select %p248, %s22, 1
        %s250 = smul.addr %s249, 8
        %s251 = smul.addr %s250, 8
        %s252 = scalar_lea.vmem %s2, %s251
        %p253 = pneg %p105
        %p254 = pneg %p102
        %s255 = smul.u32 2, %s23
        %p256 = scmp.lt.s32.totalorder %s22, 1
        %s257 = scalar_select %p256, %s22, 1
        %p258 = scmp.lt.s32.totalorder %s255, 1
        %s259 = scalar_select %p258, %s255, 1
        %s260 = smul.addr %s257, 2
        %s261 = sadd.s32 %s259, %s260
        %s262 = smul.addr %s261, 4
        %s263 = scalar_lea.vmem %s3, %s262
        %p264 = pneg %p133
        %p265 = pneg %p130
        %p266 = pneg %p161
        %p267 = pneg %p158
        %s268 = sand.u32 %s148, 1
        %s269 = scalar_lea.sflag [#allocation3], %s268
        %s270 = sand.u32 %s148, 1
        %s271 = smul.addr %s270, 8
        %s272 = scalar_lea.vmem [#allocation2], %s271
        %s273 = smul.u32 2, %s23
        %p274 = scmp.lt.s32.totalorder %s273, 1
        %s275 = scalar_select %p274, %s273, 1
        %s276 = smul.addr %s275, 2
        %s277 = scalar_lea.vmem %s0, %s276
        %s278 = smul.u32 2, %s23
        %s279 = smul.u32 2, %s23
        %p280 = scmp.lt.s32.totalorder %s22, 1
        %s281 = scalar_select %p280, %s22, 1
        %p282 = scmp.lt.s32.totalorder %s279, 1
        %s283 = scalar_select %p282, %s279, 1
        %s284 = smul.addr %s281, 2
        %s285 = sadd.s32 %s283, %s284
        %s286 = smul.addr %s285, 2
        %s287 = scalar_lea.vmem %s1, %s286
        %s288 = smul.u32 2, %s23
        %p289 = scmp.lt.s32.totalorder %s22, 1
        %s290 = scalar_select %p289, %s22, 1
        %s291 = smul.addr %s290, 8
        %s292 = smul.addr %s291, 8
        %s293 = scalar_lea.vmem %s2, %s292
        %s294 = smul.u32 2, %s23
        %p295 = scmp.lt.s32.totalorder %s22, 1
        %s296 = scalar_select %p295, %s22, 1
        %p297 = scmp.lt.s32.totalorder %s294, 1
        %s298 = scalar_select %p297, %s294, 1
        %s299 = smul.addr %s296, 2
        %s300 = sadd.s32 %s298, %s299
        %s301 = smul.addr %s300, 4
        %s302 = scalar_lea.vmem %s3, %s301
        %s303 = smul.u32 2, %s23
        %s304 = smul.u32 2, %s23
        %v305 = vld [vmem:[%s277] sm:$0xf]
        %v306 = vld [vmem:[%s287] sm:$0xf]
        %v307 = vadd.f32 %v305, %v306
        %v308 = vfloor.f32 %v307
        %v309 = vsub.f32 %v307, %v308
        %v310 = vsub.f32 1.0, %v309
        %v311 = vcvt.f32.s32.to.zero.pseudo %v308
        %v312 = vadd.s32 %v311, 1
        %v313 = vlaneseq
        %v314 = vshrl.u32 %v313, 7
        %v315 = vadd.s32 %v314, 8
        %v316 = vlaneseq
        %v317 = vshrl.u32 %v316, 7
        %v318 = vsub.s32 0, %v317
        %v319 = vrot.slane %v311, %v318
        %v320 = vlaneseq
        %v321 = vshrl.u32 %v320, 7
        %v322 = vsub.s32 2, %v321
        %v323 = vrot.slane %v311, %v322
        %v324 = vlaneseq
        %v325 = vshrl.u32 %v324, 7
        %v326 = vsub.s32 0, %v325
        %v327 = vrot.slane %v319, %v326
        %v328 = vlaneseq
        %v329 = vshrl.u32 %v328, 7
        %v330 = vsub.s32 0, %v329
        %v331 = vrot.slane %v323, %v330
        %vm332 = vcmp.eq.s32.totalorder %v314, %v327
        %vm333 = vcmp.eq.s32.totalorder %v314, %v331
        %vm334 = vcmp.eq.s32.totalorder %v315, %v327
        %vm335 = vcmp.eq.s32.totalorder %v315, %v331
        %v337 = vlaneseq
        %v338 = vshrl.u32 %v337, 7
        %v339 = vsub.s32 0, %v338
        %v340 = vrot.slane %v310, %v339
        %v341 = vlaneseq
        %v342 = vshrl.u32 %v341, 7
        %v343 = vsub.s32 2, %v342
        %v344 = vrot.slane %v310, %v343
        %v347 = vlaneseq
        %v348 = vshrl.u32 %v347, 7
        %v349 = vsub.s32 0, %v348
        %v350 = vrot.slane %v340, %v349
        %v351 = vlaneseq
        %v352 = vshrl.u32 %v351, 7
        %v353 = vsub.s32 0, %v352
        %v354 = vrot.slane %v344, %v353
        %v355 = vsel %vm332, %v350, 0.0
        %v356 = vsel %vm333, %v354, 0.0
        %v357 = vsel %vm334, %v350, 0.0
        %v358 = vsel %vm335, %v354, 0.0
        %v359 = vlaneseq
        %v360 = vshrl.u32 %v359, 7
        %v361 = vsub.s32 0, %v360
        %v362 = vrot.slane %v312, %v361
        %v363 = vlaneseq
        %v364 = vshrl.u32 %v363, 7
        %v365 = vsub.s32 2, %v364
        %v366 = vrot.slane %v312, %v365
        %v367 = vlaneseq
        %v368 = vshrl.u32 %v367, 7
        %v369 = vsub.s32 0, %v368
        %v370 = vrot.slane %v362, %v369
        %v371 = vlaneseq
        %v372 = vshrl.u32 %v371, 7
        %v373 = vsub.s32 0, %v372
        %v374 = vrot.slane %v366, %v373
        %vm375 = vcmp.eq.s32.totalorder %v314, %v370
        %vm376 = vcmp.eq.s32.totalorder %v314, %v374
        %vm377 = vcmp.eq.s32.totalorder %v315, %v370
        %vm378 = vcmp.eq.s32.totalorder %v315, %v374
        %v380 = vlaneseq
        %v381 = vshrl.u32 %v380, 7
        %v382 = vsub.s32 0, %v381
        %v383 = vrot.slane %v309, %v382
        %v384 = vlaneseq
        %v385 = vshrl.u32 %v384, 7
        %v386 = vsub.s32 2, %v385
        %v387 = vrot.slane %v309, %v386
        %v390 = vlaneseq
        %v391 = vshrl.u32 %v390, 7
        %v392 = vsub.s32 0, %v391
        %v393 = vrot.slane %v383, %v392
        %v394 = vlaneseq
        %v395 = vshrl.u32 %v394, 7
        %v396 = vsub.s32 0, %v395
        %v397 = vrot.slane %v387, %v396
        %v398 = vsel %vm375, %v393, 0.0
        %v399 = vsel %vm376, %v397, 0.0
        %v400 = vsel %vm377, %v393, 0.0
        %v401 = vsel %vm378, %v397, 0.0
        %v402 = vadd.f32 %v355, %v398
        %v403 = vadd.f32 %v356, %v399
        %v404 = vadd.f32 %v357, %v400
        %v405 = vadd.f32 %v358, %v401
        %v406 = vlaneseq
        %v407 = vshrl.u32 %v406, 7
        %v408 = vsub.s32 1, %v407
        %v409 = vrot.slane %v311, %v408
        %v410 = vlaneseq
        %v411 = vshrl.u32 %v410, 7
        %v412 = vsub.s32 3, %v411
        %v413 = vrot.slane %v311, %v412
        %v414 = vlaneseq
        %v415 = vshrl.u32 %v414, 7
        %v416 = vsub.s32 1, %v415
        %v417 = vrot.slane %v409, %v416
        %v418 = vlaneseq
        %v419 = vshrl.u32 %v418, 7
        %v420 = vsub.s32 1, %v419
        %v421 = vrot.slane %v413, %v420
        %vm422 = vcmp.eq.s32.totalorder %v314, %v417
        %vm423 = vcmp.eq.s32.totalorder %v314, %v421
        %vm424 = vcmp.eq.s32.totalorder %v315, %v417
        %vm425 = vcmp.eq.s32.totalorder %v315, %v421
        %v426 = vlaneseq
        %v427 = vshrl.u32 %v426, 7
        %v428 = vsub.s32 1, %v427
        %v429 = vrot.slane %v310, %v428
        %v430 = vlaneseq
        %v431 = vshrl.u32 %v430, 7
        %v432 = vsub.s32 3, %v431
        %v433 = vrot.slane %v310, %v432
        %v436 = vlaneseq
        %v437 = vshrl.u32 %v436, 7
        %v438 = vsub.s32 1, %v437
        %v439 = vrot.slane %v429, %v438
        %v440 = vlaneseq
        %v441 = vshrl.u32 %v440, 7
        %v442 = vsub.s32 1, %v441
        %v443 = vrot.slane %v433, %v442
        %v444 = vsel %vm422, %v439, 0.0
        %v445 = vsel %vm423, %v443, 0.0
        %v446 = vsel %vm424, %v439, 0.0
        %v447 = vsel %vm425, %v443, 0.0
        %v448 = vlaneseq
        %v449 = vshrl.u32 %v448, 7
        %v450 = vsub.s32 1, %v449
        %v451 = vrot.slane %v312, %v450
        %v452 = vlaneseq
        %v453 = vshrl.u32 %v452, 7
        %v454 = vsub.s32 3, %v453
        %v455 = vrot.slane %v312, %v454
        %v456 = vlaneseq
        %v457 = vshrl.u32 %v456, 7
        %v458 = vsub.s32 1, %v457
        %v459 = vrot.slane %v451, %v458
        %v460 = vlaneseq
        %v461 = vshrl.u32 %v460, 7
        %v462 = vsub.s32 1, %v461
        %v463 = vrot.slane %v455, %v462
        %vm464 = vcmp.eq.s32.totalorder %v314, %v459
        %vm465 = vcmp.eq.s32.totalorder %v314, %v463
        %vm466 = vcmp.eq.s32.totalorder %v315, %v459
        %vm467 = vcmp.eq.s32.totalorder %v315, %v463
        %v468 = vlaneseq
        %v469 = vshrl.u32 %v468, 7
        %v470 = vsub.s32 1, %v469
        %v471 = vrot.slane %v309, %v470
        %v472 = vlaneseq
        %v473 = vshrl.u32 %v472, 7
        %v474 = vsub.s32 3, %v473
        %v475 = vrot.slane %v309, %v474
        %v478 = vlaneseq
        %v479 = vshrl.u32 %v478, 7
        %v480 = vsub.s32 1, %v479
        %v481 = vrot.slane %v471, %v480
        %v482 = vlaneseq
        %v483 = vshrl.u32 %v482, 7
        %v484 = vsub.s32 1, %v483
        %v485 = vrot.slane %v475, %v484
        %v486 = vsel %vm464, %v481, 0.0
        %v487 = vsel %vm465, %v485, 0.0
        %v488 = vsel %vm466, %v481, 0.0
        %v489 = vsel %vm467, %v485, 0.0
        %v490 = vadd.f32 %v444, %v486
        %v491 = vadd.f32 %v445, %v487
        %v492 = vadd.f32 %v446, %v488
        %v493 = vadd.f32 %v447, %v489
        %v494 = vld [vmem:[%s293] sm:$0xff]
        %v495 = vld [vmem:[%s293 + $0x8] sm:$0xff]
        %v496 = vld [vmem:[%s293 + $0x10] sm:$0xff]
        %v497 = vld [vmem:[%s293 + $0x18] sm:$0xff]
        %v498 = vld [vmem:[%s293 + $0x20] sm:$0xff]
        %v499 = vld [vmem:[%s293 + $0x28] sm:$0xff]
        %v500 = vld [vmem:[%s293 + $0x30] sm:$0xff]
        %v501 = vld [vmem:[%s293 + $0x38] sm:$0xff]
        %vm502 = vcmask 130048
        %v504 = vsel %vm502, %v494, 0
        %v507 = vsel %vm502, %v495, 0
        %v510 = vsel %vm502, %v496, 0
        %v513 = vsel %vm502, %v497, 0
        %v516 = vsel %vm502, %v498, 0
        %v519 = vsel %vm502, %v499, 0
        %v522 = vsel %vm502, %v500, 0
        %v525 = vsel %vm502, %v501, 0
        %527 = vmatprep.subr.mxu0 0.0
        %528 = vmatpush1.msra.mxu0 0.0
        %529 = vmatprep.subr.mxu0 0.0
        %530 = vmatpush1.msra.mxu0 0.0
        %531 = vmatprep.subr.mxu0 0.0
        %532 = vmatpush1.msra.mxu0 0.0
        %533 = vmatprep.subr.mxu0 0.0
        %534 = vmatpush1.msra.mxu0 0.0
        %535 = vmatprep.subr.mxu0 0.0
        %536 = vmatpush1.msra.mxu0 0.0
        %537 = vmatprep.subr.mxu0 0.0
        %538 = vmatpush1.msra.mxu0 0.0
        %539 = vmatprep.subr.mxu0 0.0
        %540 = vmatpush1.msra.mxu0 0.0
        %541 = vmatprep.subr.mxu0 0.0
        %542 = vmatpush1.msra.mxu0 0.0
        %543 = vmatprep.subr.mxu0 0.0
        %544 = vmatpush1.msra.mxu0 0.0
        %545 = vmatprep.subr.mxu0 0.0
        %546 = vmatpush1.msra.mxu0 0.0
        %547 = vmatprep.subr.mxu0 0.0
        %548 = vmatpush1.msra.mxu0 0.0
        %549 = vmatprep.subr.mxu0 0.0
        %550 = vmatpush1.msra.mxu0 0.0
        %551 = vmatprep.subr.mxu0 0.0
        %552 = vmatpush1.msra.mxu0 0.0
        %553 = vmatprep.subr.mxu0 0.0
        %554 = vmatpush1.msra.mxu0 0.0
        %555 = vmatprep.subr.mxu0 %v405
        %556 = vmatpush1.msra.mxu0 %v404
        %557 = vmatprep.subr.mxu0 %v403
        %558 = vmatpush1.msra.mxu0 %v402
        %559 = vmatprep.subr.mxu0 0.0
        %560 = vmatpush2.msra.mxu0 0.0
        %561 = vmatprep.subr.mxu0 0.0
        %562 = vmatpush2.msra.mxu0 0.0
        %563 = vmatprep.subr.mxu0 0.0
        %564 = vmatpush2.msra.mxu0 0.0
        %565 = vmatprep.subr.mxu0 0.0
        %566 = vmatpush2.msra.mxu0 0.0
        %567 = vmatprep.subr.mxu0 0.0
        %568 = vmatpush2.msra.mxu0 0.0
        %569 = vmatprep.subr.mxu0 0.0
        %570 = vmatpush2.msra.mxu0 0.0
        %571 = vmatprep.subr.mxu0 0.0
        %572 = vmatpush2.msra.mxu0 0.0
        %573 = vmatprep.subr.mxu0 0.0
        %574 = vmatpush2.msra.mxu0 0.0
        %575 = vmatprep.subr.mxu0 0.0
        %576 = vmatpush2.msra.mxu0 0.0
        %577 = vmatprep.subr.mxu0 0.0
        %578 = vmatpush2.msra.mxu0 0.0
        %579 = vmatprep.subr.mxu0 0.0
        %580 = vmatpush2.msra.mxu0 0.0
        %581 = vmatprep.subr.mxu0 0.0
        %582 = vmatpush2.msra.mxu0 0.0
        %583 = vmatprep.subr.mxu0 0.0
        %584 = vmatpush2.msra.mxu0 0.0
        %585 = vmatprep.subr.mxu0 0.0
        %586 = vmatpush2.msra.mxu0 0.0
        %587 = vmatprep.subr.mxu0 0.0
        %588 = vmatpush2.msra.mxu0 0.0
        %589 = vmatprep.subr.mxu0 0.0
        %590 = vmatpush2.msra.mxu0 0.0
        %591 = vmatprep.mubr.f32.mxu0 0.0
        %592 = vmatmul.mubr.f32.gmra.mxu0 %v504
        %v593 = vpop.f32.mrf.mxu0
        %v594 = vadd.f32 0.0, %v593
        %v595 = vpop.f32.mrf.mxu0
        %v596 = vadd.f32 0.0, %v595
        %597 = vmatprep.mubr.f32.mxu0 0.0
        %598 = vmatmul.mubr.f32.gmra.mxu0 %v507
        %v599 = vpop.f32.mrf.mxu0
        %v600 = vadd.f32 0.0, %v599
        %v601 = vpop.f32.mrf.mxu0
        %v602 = vadd.f32 0.0, %v601
        %603 = vmatprep.mubr.f32.mxu0 0.0
        %604 = vmatmul.mubr.f32.gmra.mxu0 %v510
        %v605 = vpop.f32.mrf.mxu0
        %v606 = vadd.f32 0.0, %v605
        %v607 = vpop.f32.mrf.mxu0
        %v608 = vadd.f32 0.0, %v607
        %609 = vmatprep.mubr.f32.mxu0 0.0
        %610 = vmatmul.mubr.f32.gmra.mxu0 %v513
        %v611 = vpop.f32.mrf.mxu0
        %v612 = vadd.f32 0.0, %v611
        %v613 = vpop.f32.mrf.mxu0
        %v614 = vadd.f32 0.0, %v613
        %615 = vmatprep.mubr.f32.mxu0 0.0
        %616 = vmatmul.mubr.f32.gmra.mxu0 %v516
        %v617 = vpop.f32.mrf.mxu0
        %v618 = vadd.f32 0.0, %v617
        %v619 = vpop.f32.mrf.mxu0
        %v620 = vadd.f32 0.0, %v619
        %621 = vmatprep.mubr.f32.mxu0 0.0
        %622 = vmatmul.mubr.f32.gmra.mxu0 %v519
        %v623 = vpop.f32.mrf.mxu0
        %v624 = vadd.f32 0.0, %v623
        %v625 = vpop.f32.mrf.mxu0
        %v626 = vadd.f32 0.0, %v625
        %627 = vmatprep.mubr.f32.mxu0 0.0
        %628 = vmatmul.mubr.f32.gmra.mxu0 %v522
        %v629 = vpop.f32.mrf.mxu0
        %v630 = vadd.f32 0.0, %v629
        %v631 = vpop.f32.mrf.mxu0
        %v632 = vadd.f32 0.0, %v631
        %633 = vmatprep.mubr.f32.mxu0 0.0
        %634 = vmatmul.mubr.f32.gmra.mxu0 %v525
        %v635 = vpop.f32.mrf.mxu0
        %v636 = vadd.f32 0.0, %v635
        %v637 = vpop.f32.mrf.mxu0
        %v638 = vadd.f32 0.0, %v637
        %639 = vdwg.mxu0
        %v640 = vmul.f32 %v594, %v490
        %v641 = vmul.f32 %v596, %v491
        %v642 = vmul.f32 %v600, %v492
        %v643 = vmul.f32 %v602, %v493
        %v644 = vadd.f32 %v640, %v642
        %v645 = vrot.slane %v644, 4
        %v646 = vadd.f32 %v644, %v645
        %v647 = vrot.slane %v646, 2
        %v648 = vadd.f32 %v646, %v647
        %v649 = vrot.slane %v648, 1
        %v650 = vadd.f32 %v648, %v649
        %v651 = vadd.f32 %v641, %v643
        %v652 = vrot.slane %v651, 4
        %v653 = vadd.f32 %v651, %v652
        %v654 = vrot.slane %v653, 2
        %v655 = vadd.f32 %v653, %v654
        %v656 = vrot.slane %v655, 1
        %v657 = vadd.f32 %v655, %v656
        %v658 = vmul.f32 %v606, %v490
        %v659 = vmul.f32 %v608, %v491
        %v660 = vmul.f32 %v612, %v492
        %v661 = vmul.f32 %v614, %v493
        %v662 = vadd.f32 %v658, %v660
        %v663 = vrot.slane %v662, 4
        %v664 = vadd.f32 %v662, %v663
        %v665 = vrot.slane %v664, 2
        %v666 = vadd.f32 %v664, %v665
        %v667 = vrot.slane %v666, 1
        %v668 = vadd.f32 %v666, %v667
        %v669 = vadd.f32 %v659, %v661
        %v670 = vrot.slane %v669, 4
        %v671 = vadd.f32 %v669, %v670
        %v672 = vrot.slane %v671, 2
        %v673 = vadd.f32 %v671, %v672
        %v674 = vrot.slane %v673, 1
        %v675 = vadd.f32 %v673, %v674
        %v676 = vmul.f32 %v618, %v490
        %v677 = vmul.f32 %v620, %v491
        %v678 = vmul.f32 %v624, %v492
        %v679 = vmul.f32 %v626, %v493
        %v680 = vadd.f32 %v676, %v678
        %v681 = vrot.slane %v680, 4
        %v682 = vadd.f32 %v680, %v681
        %v683 = vrot.slane %v682, 2
        %v684 = vadd.f32 %v682, %v683
        %v685 = vrot.slane %v684, 1
        %v686 = vadd.f32 %v684, %v685
        %v687 = vadd.f32 %v677, %v679
        %v688 = vrot.slane %v687, 4
        %v689 = vadd.f32 %v687, %v688
        %v690 = vrot.slane %v689, 2
        %v691 = vadd.f32 %v689, %v690
        %v692 = vrot.slane %v691, 1
        %v693 = vadd.f32 %v691, %v692
        %v694 = vmul.f32 %v630, %v490
        %v695 = vmul.f32 %v632, %v491
        %v696 = vmul.f32 %v636, %v492
        %v697 = vmul.f32 %v638, %v493
        %v698 = vadd.f32 %v694, %v696
        %v699 = vrot.slane %v698, 4
        %v700 = vadd.f32 %v698, %v699
        %v701 = vrot.slane %v700, 2
        %v702 = vadd.f32 %v700, %v701
        %v703 = vrot.slane %v702, 1
        %v704 = vadd.f32 %v702, %v703
        %v705 = vadd.f32 %v695, %v697
        %v706 = vrot.slane %v705, 4
        %v707 = vadd.f32 %v705, %v706
        %v708 = vrot.slane %v707, 2
        %v709 = vadd.f32 %v707, %v708
        %v710 = vrot.slane %v709, 1
        %v711 = vadd.f32 %v709, %v710
        %vm712 = vcmask 1040384
        %v713 = vsel %vm712, %v650, %v668
        %v714 = vsel %vm712, %v657, %v675
        %vm715 = vcmask 1041408
        %v716 = vsel %vm715, %v713, %v686
        %v717 = vsel %vm715, %v714, %v693
        %vm718 = vcmask 1042432
        %v719 = vsel %vm718, %v716, %v704
        %v720 = vsel %vm718, %v717, %v711
        %v721 = vld [vmem:[%s302] sm:$0xff]
        %v724 = vcombine.low %v719, %v720
        %v726 = vsub.f32 %v721, %v724
        %727 = vst [vmem:[%s272] sm:$0xff] %v726
        %s728 = sand.u32 %s148, 1
        %s729 = scalar_lea.sflag [#allocation3], %s728
        %s730 = sand.u32 %s148, 1
        %s731 = smul.addr %s730, 8
        %s732 = scalar_lea.vmem [#allocation2], %s731
        // Predicated region
        $region37: #{tpu_custom_call.1} parent=35 // pred_check
          %p733 = pneg %p158
        $region38: #{tpu_custom_call.1} parent=35 // pred_check_branch
          %735 = sbr.rel (%p733) target = $region40
        $region39: #{tpu_custom_call.1} parent=35 // pred_region
          %s736 = smul.u32 2, %s23
          %s738 = ssub.s32 128, 128
          %739 = vsyncadd %s729, %s738
          %s740 = smul.addr %s22, 2
          %s741 = sadd.s32 %s736, %s740
          %s742 = smul.addr %s741, 64
          %s743 = scalar_lea.hbm %s4, %s742
          %s745 = sshll.u32 %s732, 4
          %s746 = int_to_ptr.vmem [resolvable:$true] %s745
          %748 = dma.vmem_to_hbm [thread:$0]  %s746, 128, %s743, %s729
        $region40: #{tpu_custom_call.1} parent=35 // pred_fallthru
          _
      $region36: #{tpu_custom_call.1} parent=5 // pred_fallthru
        _
      %p749 = scmp.le.s32.totalorder 2, %s13
      // Predicated region
      $region41: #{tpu_custom_call.1} parent=5 // pred_check
        %p750 = pneg %p749
      $region42: #{tpu_custom_call.1} parent=5 // pred_check_branch
        %752 = sbr.rel (%p750) target = $region44
      $region43: #{tpu_custom_call.1} parent=5 // pred_region
        %s753 = ssub.s32 %s13, 2
        // Predicated region
        $region45: #{tpu_custom_call.1} parent=43 // pred_check
          %p754 = pneg %p164
        $region46: #{tpu_custom_call.1} parent=43 // pred_check_branch
          %756 = sbr.rel (%p754) target = $region48
        $region47: #{tpu_custom_call.1} parent=43 // pred_region
          %s757 = sand.u32 %s149, 1
          %s758 = scalar_lea.sflag [#allocation3], %s757
          %s759 = sand.u32 %s149, 1
          %s760 = smul.addr %s759, 8
          %s761 = scalar_lea.vmem [#allocation2], %s760
          %762 = dma.done %s758, 128
        $region48: #{tpu_custom_call.1} parent=43 // pred_fallthru
          _
      $region44: #{tpu_custom_call.1} parent=5 // pred_fallthru
        _
    $region6: #{tpu_custom_call.1} parent=1 // loop_footer
      %s17 = sadd.s32 1, %s13
    $region7: #{tpu_custom_call.1} parent=1 // loop_footer_branch
      %12 = sbr.rel target = $region3
    $region8: #{tpu_custom_call.1} parent=1 // loop_exit
      _
    %763 = vsyncpa [#allocation3], 1
    %s764 = scalar_lea.sflag [#allocation3], 1
    %765 = vsyncpa %s764, 1

</llo_original>
